<compile_context>
chip_gen: v7x
topology: tpu7x:2x2x1
jax: 0.10.0
libtpu: 0.0.40
codegen_flags: <defaults>
</compile_context>

<pallas_src>
import jax
import jax.numpy as jnp
from jax import lax
from jax.experimental import pallas as pl
from jax.experimental.pallas import tpu as pltpu


# ------------------------------- Pallas kernel -------------------------------
def _banded_conv(x, m_ref, s_dn, s_up):
    """3x3 'same' conv in lane-packed form.

    x     : (H, K)     lane-packed input rows (K = W*Cin_of_this_conv)
    m_ref : (3, K, Nl) banded matrices, one per kernel row kh (Nl = W*Cout)
    s_dn  : (H, H)     shift matrix, (s_dn @ y)[h] = y[h-1]  (row 0 -> 0)
    s_up  : (H, H)     shift matrix, (s_up @ y)[h] = y[h+1]  (row H-1 -> 0)

    out[h] = y0[h-1] + y1[h] + y2[h+1]  with  y_kh = x @ m_ref[kh]
    (the zero rows injected by s_dn / s_up are exactly the H-axis padding=1).
    """
    y0 = jnp.dot(x, m_ref[0], preferred_element_type=jnp.float32)
    y1 = jnp.dot(x, m_ref[1], preferred_element_type=jnp.float32)
    y2 = jnp.dot(x, m_ref[2], preferred_element_type=jnp.float32)
    return (jnp.dot(s_dn, y0, preferred_element_type=jnp.float32)
            + y1
            + jnp.dot(s_up, y2, preferred_element_type=jnp.float32))


def _conv_block_kernel(x_ref, m1_ref, b1_ref, m2_ref, b2_ref, o_ref):
    """Fused (conv3x3 + BN + LeakyReLU) x 2, lane-packed layout.

    x_ref : (1, H, W*Cin)    packed input rows (one batch element)
    m1_ref: (3, W*Cin, W*Cout)   banded conv1 matrices (BN scale folded in)
    m2_ref: (3, W*Cout, W*Cout)  banded conv2 matrices (BN scale folded in)
    b*_ref: (1, W*Cout)      folded per-lane bias (conv bias + BN shift)
    o_ref : (1, H, W*Cout)   lane-dense output
    """
    H = o_ref.shape[1]
    x = x_ref[0]                                   # (H, W*Cin)

    # Shift matrices built once per body (hoisted out of both convs).
    r = lax.broadcasted_iota(jnp.int32, (H, H), 0)
    c = lax.broadcasted_iota(jnp.int32, (H, H), 1)
    s_dn = (c == r - 1).astype(jnp.float32)
    s_up = (c == r + 1).astype(jnp.float32)

    # conv1 + BN(eval) + LeakyReLU(0.2)  -- full-width VPU epilogue.
    y = _banded_conv(x, m1_ref, s_dn, s_up) + b1_ref[...]
    y = jnp.where(y >= 0, y, 0.2 * y)

    # conv2 + BN(eval) + LeakyReLU(0.2)  -- no re-pad needed, y stays packed.
    z = _banded_conv(y, m2_ref, s_dn, s_up) + b2_ref[...]
    z = jnp.where(z >= 0, z, 0.2 * z)

    o_ref[...] = z[None].astype(o_ref.dtype)       # single lane-dense store


# --------------------------------- wrapper -----------------------------------
def conv_block_forward(x_nchw, m1, b1, m2, b2):
    """x_nchw: (N, Cin, H, W) f32 -> (N, Cout, H, W) f32."""
    N, Cin, H, W = x_nchw.shape
    WCin = W * Cin
    WCout = m1.shape[2]
    Cout = WCout // W

    # NCHW -> lane-packed (N, H, W*Cin); no HBM-side spatial padding anymore.
    x_packed = jnp.transpose(x_nchw, (0, 2, 3, 1)).reshape(N, H, WCin)

    out_packed = pl.pallas_call(
        _conv_block_kernel,
        grid=(N,),
        in_specs=[
            pl.BlockSpec((1, H, WCin), lambda n: (n, 0, 0)),
            pl.BlockSpec((3, WCin, WCout), lambda n: (0, 0, 0)),
            pl.BlockSpec((1, WCout), lambda n: (0, 0)),
            pl.BlockSpec((3, WCout, WCout), lambda n: (0, 0, 0)),
            pl.BlockSpec((1, WCout), lambda n: (0, 0)),
        ],
        out_specs=pl.BlockSpec((1, H, WCout), lambda n: (n, 0, 0)),
        out_shape=jax.ShapeDtypeStruct((N, H, WCout), x_nchw.dtype),
        compiler_params=pltpu.CompilerParams(
            dimension_semantics=("parallel",)),
    )(x_packed, m1, b1, m2, b2)

    # Unpack lanes (w, co) and go back to NCHW.
    return jnp.transpose(out_packed.reshape(N, H, W, Cout), (0, 3, 1, 2))


# --------------------------- parameter preparation ---------------------------
def _build_banded(w_oihw, scale, W):
    """Fold 3x3 kw-taps + W zero-padding + BN scale into banded matrices.

    w_oihw: (Cout, Cin, 3, 3) PyTorch conv weight;  scale: (Cout,) BN scale.
    Returns M of shape (3, W*Cin, W*Cout) with
      M[kh, w_in*Cin+ci, w_out*Cout+co] = w[co,ci,kh,kw]*scale[co],
      kw = w_in - w_out + 1, zero outside the 3-tap band (== padding=1 along W).
    """
    Cout, Cin, KH, KW = w_oihw.shape
    wt = jnp.transpose(w_oihw, (2, 3, 1, 0)) * scale[None, None, None, :]  # (3,3,Cin,Cout)
    w_in = jnp.arange(W)[:, None]
    w_out = jnp.arange(W)[None, :]
    kw = w_in - w_out + 1                                   # (W, W)
    valid = (kw >= 0) & (kw < KW)
    kw_safe = jnp.clip(kw, 0, KW - 1)
    blocks = wt[:, kw_safe]                                 # (3, W, W, Cin, Cout)
    blocks = blocks * valid[None, :, :, None, None].astype(wt.dtype)
    M = jnp.transpose(blocks, (0, 1, 3, 2, 4)).reshape(KH, W * Cin, W * Cout)
    return M.astype(jnp.float32)


def prepare_conv_block_params(w1_oihw, cb1, g1, be1, rm1, rv1,
                              w2_oihw, cb2, g2, be2, rm2, rv2, W, eps=1e-5):
    """Fold conv bias + eval-mode BN into banded matrices / packed biases."""
    Cout = w1_oihw.shape[0]
    s1 = g1 / jnp.sqrt(rv1 + eps)
    b1 = (cb1 - rm1) * s1 + be1
    s2 = g2 / jnp.sqrt(rv2 + eps)
    b2 = (cb2 - rm2) * s2 + be2

    m1 = _build_banded(w1_oihw, s1, W)                      # (3, W*Cin,  W*Cout)
    m2 = _build_banded(w2_oihw, s2, W)                      # (3, W*Cout, W*Cout)
    b1p = jnp.tile(b1, W).reshape(1, W * Cout)              # lane index w*Cout+co
    b2p = jnp.tile(b2, W).reshape(1, W * Cout)
    return m1, b1p, m2, b2p


# ---------------------------- reference (pure JAX) ----------------------------
def _reference_forward(x, w1_oihw, cb1, g1, be1, rm1, rv1,
                       w2_oihw, cb2, g2, be2, rm2, rv2):
    eps = 1e-5

    def conv(x, w, b):
        y = lax.conv_general_dilated(
            x, w, window_strides=(1, 1), padding=((1, 1), (1, 1)),
            dimension_numbers=("NCHW", "OIHW", "NCHW"))
        return y + b[None, :, None, None]

    def bn(y, g, be, m, v):
        return (y - m[None, :, None, None]) * (
            g[None, :, None, None] / jnp.sqrt(v[None, :, None, None] + eps)
        ) + be[None, :, None, None]

    def lrelu(y):
        return jnp.where(y >= 0, y, 0.2 * y)

    y = lrelu(bn(conv(x, w1_oihw, cb1), g1, be1, rm1, rv1))
    y = lrelu(bn(conv(y, w2_oihw, cb2), g2, be2, rm2, rv2))
    return y


if __name__ == "__main__":
    # Small shapes consistent with the module: N=2, Cin=4, Cout=8, H=W=16.
    N, Cin, Cout, H, W = 2, 4, 8, 16, 16

    key = jax.random.PRNGKey(0)
    ks = jax.random.split(key, 16)

    x = jax.random.normal(ks[0], (N, Cin, H, W), jnp.float32)

    # Conv weights in PyTorch OIHW convention, then BN params (eval-mode stats).
    w1_oihw = 0.2 * jax.random.normal(ks[1], (Cout, Cin, 3, 3), jnp.float32)
    cb1 = 0.1 * jax.random.normal(ks[2], (Cout,), jnp.float32)
    g1 = 1.0 + 0.1 * jax.random.normal(ks[3], (Cout,), jnp.float32)
    be1 = 0.1 * jax.random.normal(ks[4], (Cout,), jnp.float32)
    rm1 = 0.1 * jax.random.normal(ks[5], (Cout,), jnp.float32)
    rv1 = 0.5 + jnp.abs(jax.random.normal(ks[6], (Cout,), jnp.float32))

    w2_oihw = 0.2 * jax.random.normal(ks[7], (Cout, Cout, 3, 3), jnp.float32)
    cb2 = 0.1 * jax.random.normal(ks[8], (Cout,), jnp.float32)
    g2 = 1.0 + 0.1 * jax.random.normal(ks[9], (Cout,), jnp.float32)
    be2 = 0.1 * jax.random.normal(ks[10], (Cout,), jnp.float32)
    rm2 = 0.1 * jax.random.normal(ks[11], (Cout,), jnp.float32)
    rv2 = 0.5 + jnp.abs(jax.random.normal(ks[12], (Cout,), jnp.float32))

    m1, b1p, m2, b2p = prepare_conv_block_params(
        w1_oihw, cb1, g1, be1, rm1, rv1,
        w2_oihw, cb2, g2, be2, rm2, rv2, W)

    out = conv_block_forward(x, m1, b1p, m2, b2p)
    out = jax.block_until_ready(out)

    ref = _reference_forward(
        x, w1_oihw, cb1, g1, be1, rm1, rv1,
        w2_oihw, cb2, g2, be2, rm2, rv2)
    ref = jax.block_until_ready(ref)

    assert out.shape == (N, Cout, H, W)
    assert jnp.allclose(out, ref, atol=1e-3, rtol=1e-3), (
        float(jnp.max(jnp.abs(out - ref))))

    print("KERNEL_OK")
</pallas_src>

<mosaic_0001>
module attributes {stable_mosaic.version = 11 : i64} {
  func.func @_conv_block_kernel(%arg0: i32, %arg1: memref<1x16x64xf32, #tpu.memory_space<vmem>>, %arg2: memref<3x64x128xf32, #tpu.memory_space<vmem>>, %arg3: memref<1x128xf32, #tpu.memory_space<vmem>>, %arg4: memref<3x128x128xf32, #tpu.memory_space<vmem>>, %arg5: memref<1x128xf32, #tpu.memory_space<vmem>>, %arg6: memref<1x16x128xf32, #tpu.memory_space<vmem>>) attributes {dimension_semantics = [#tpu.dimension_semantics<parallel>], iteration_bounds = array<i64: 2>, scalar_prefetch = 0 : i64, scratch_operands = 0 : i64, tpu.core_type = #tpu.core_type<tc>, window_params = [{transform_indices = @transform_0, window_bounds = array<i64: 1, 16, 64>}, {pipeline_mode = #tpu.pipeline_mode<synchronous>, transform_indices = @transform_1, window_bounds = array<i64: 3, 64, 128>}, {pipeline_mode = #tpu.pipeline_mode<synchronous>, transform_indices = @transform_2, window_bounds = array<i64: 1, 128>}, {pipeline_mode = #tpu.pipeline_mode<synchronous>, transform_indices = @transform_3, window_bounds = array<i64: 3, 128, 128>}, {pipeline_mode = #tpu.pipeline_mode<synchronous>, transform_indices = @transform_4, window_bounds = array<i64: 1, 128>}, {transform_indices = @transform_5, window_bounds = array<i64: 1, 16, 128>}]} {
    %c0 = arith.constant 0 : index
    %c0_0 = arith.constant 0 : index
    %c0_1 = arith.constant 0 : index
    %0 = vector.load %arg1[%c0, %c0_0, %c0_1] : memref<1x16x64xf32, #tpu.memory_space<vmem>>, vector<1x16x64xf32>
    %1 = vector.shape_cast %0 : vector<1x16x64xf32> to vector<16x64xf32>
    %2 = tpu.iota {dimensions = array<i32: 0>} : vector<16x16xi32>
    %3 = tpu.iota {dimensions = array<i32: 1>} : vector<16x16xi32>
    %c1_i32 = arith.constant 1 : i32
    %4 = vector.broadcast %c1_i32 : i32 to vector<16x16xi32>
    %5 = arith.subi %2, %4 : vector<16x16xi32>
    %6 = arith.cmpi eq, %3, %5 : vector<16x16xi32>
    %7 = arith.extui %6 : vector<16x16xi1> to vector<16x16xi32>
    %8 = arith.sitofp %7 : vector<16x16xi32> to vector<16x16xf32>
    %c1_i32_2 = arith.constant 1 : i32
    %9 = vector.broadcast %c1_i32_2 : i32 to vector<16x16xi32>
    %10 = arith.addi %2, %9 : vector<16x16xi32>
    %11 = arith.cmpi eq, %3, %10 : vector<16x16xi32>
    %12 = arith.extui %11 : vector<16x16xi1> to vector<16x16xi32>
    %13 = arith.sitofp %12 : vector<16x16xi32> to vector<16x16xf32>
    %c0_3 = arith.constant 0 : index
    %c0_4 = arith.constant 0 : index
    %c0_5 = arith.constant 0 : index
    %14 = vector.load %arg2[%c0_3, %c0_4, %c0_5] : memref<3x64x128xf32, #tpu.memory_space<vmem>>, vector<1x64x128xf32>
    %15 = vector.shape_cast %14 : vector<1x64x128xf32> to vector<64x128xf32>
    %cst = arith.constant dense<0.000000e+00> : vector<16x128xf32>
    %16 = tpu.matmul %1, %15, %cst {dimension_numbers = #tpu.dot_dimension_numbers<[1], [0], [0], [1], [0, 0, 1, 1], [], []>} : vector<16x64xf32>, vector<64x128xf32>, vector<16x128xf32> -> vector<16x128xf32>
    %c1 = arith.constant 1 : index
    %c0_6 = arith.constant 0 : index
    %c0_7 = arith.constant 0 : index
    %17 = vector.load %arg2[%c1, %c0_6, %c0_7] : memref<3x64x128xf32, #tpu.memory_space<vmem>>, vector<1x64x128xf32>
    %18 = vector.shape_cast %17 : vector<1x64x128xf32> to vector<64x128xf32>
    %cst_8 = arith.constant dense<0.000000e+00> : vector<16x128xf32>
    %19 = tpu.matmul %1, %18, %cst_8 {dimension_numbers = #tpu.dot_dimension_numbers<[1], [0], [0], [1], [0, 0, 1, 1], [], []>} : vector<16x64xf32>, vector<64x128xf32>, vector<16x128xf32> -> vector<16x128xf32>
    %c2 = arith.constant 2 : index
    %c0_9 = arith.constant 0 : index
    %c0_10 = arith.constant 0 : index
    %20 = vector.load %arg2[%c2, %c0_9, %c0_10] : memref<3x64x128xf32, #tpu.memory_space<vmem>>, vector<1x64x128xf32>
    %21 = vector.shape_cast %20 : vector<1x64x128xf32> to vector<64x128xf32>
    %cst_11 = arith.constant dense<0.000000e+00> : vector<16x128xf32>
    %22 = tpu.matmul %1, %21, %cst_11 {dimension_numbers = #tpu.dot_dimension_numbers<[1], [0], [0], [1], [0, 0, 1, 1], [], []>} : vector<16x64xf32>, vector<64x128xf32>, vector<16x128xf32> -> vector<16x128xf32>
    %cst_12 = arith.constant dense<0.000000e+00> : vector<16x128xf32>
    %23 = tpu.matmul %8, %16, %cst_12 {dimension_numbers = #tpu.dot_dimension_numbers<[1], [0], [0], [1], [0, 0, 1, 1], [], []>} : vector<16x16xf32>, vector<16x128xf32>, vector<16x128xf32> -> vector<16x128xf32>
    %24 = arith.addf %23, %19 : vector<16x128xf32>
    %cst_13 = arith.constant dense<0.000000e+00> : vector<16x128xf32>
    %25 = tpu.matmul %13, %22, %cst_13 {dimension_numbers = #tpu.dot_dimension_numbers<[1], [0], [0], [1], [0, 0, 1, 1], [], []>} : vector<16x16xf32>, vector<16x128xf32>, vector<16x128xf32> -> vector<16x128xf32>
    %26 = arith.addf %24, %25 : vector<16x128xf32>
    %c0_14 = arith.constant 0 : index
    %c0_15 = arith.constant 0 : index
    %27 = vector.load %arg3[%c0_14, %c0_15] : memref<1x128xf32, #tpu.memory_space<vmem>>, vector<1x128xf32>
    %28 = vector.broadcast %27 : vector<1x128xf32> to vector<16x128xf32>
    %29 = arith.addf %26, %28 : vector<16x128xf32>
    %cst_16 = arith.constant 0.000000e+00 : f32
    %30 = vector.broadcast %cst_16 : f32 to vector<16x128xf32>
    %31 = arith.cmpf oge, %29, %30 : vector<16x128xf32>
    %cst_17 = arith.constant 2.000000e-01 : f32
    %32 = vector.broadcast %cst_17 : f32 to vector<16x128xf32>
    %33 = arith.mulf %32, %29 : vector<16x128xf32>
    %34 = arith.select %31, %29, %33 : vector<16x128xi1>, vector<16x128xf32>
    %c0_18 = arith.constant 0 : index
    %c0_19 = arith.constant 0 : index
    %c0_20 = arith.constant 0 : index
    %35 = vector.load %arg4[%c0_18, %c0_19, %c0_20] : memref<3x128x128xf32, #tpu.memory_space<vmem>>, vector<1x128x128xf32>
    %36 = vector.shape_cast %35 : vector<1x128x128xf32> to vector<128x128xf32>
    %cst_21 = arith.constant dense<0.000000e+00> : vector<16x128xf32>
    %37 = tpu.matmul %34, %36, %cst_21 {dimension_numbers = #tpu.dot_dimension_numbers<[1], [0], [0], [1], [0, 0, 1, 1], [], []>} : vector<16x128xf32>, vector<128x128xf32>, vector<16x128xf32> -> vector<16x128xf32>
    %c1_22 = arith.constant 1 : index
    %c0_23 = arith.constant 0 : index
    %c0_24 = arith.constant 0 : index
    %38 = vector.load %arg4[%c1_22, %c0_23, %c0_24] : memref<3x128x128xf32, #tpu.memory_space<vmem>>, vector<1x128x128xf32>
    %39 = vector.shape_cast %38 : vector<1x128x128xf32> to vector<128x128xf32>
    %cst_25 = arith.constant dense<0.000000e+00> : vector<16x128xf32>
    %40 = tpu.matmul %34, %39, %cst_25 {dimension_numbers = #tpu.dot_dimension_numbers<[1], [0], [0], [1], [0, 0, 1, 1], [], []>} : vector<16x128xf32>, vector<128x128xf32>, vector<16x128xf32> -> vector<16x128xf32>
    %c2_26 = arith.constant 2 : index
    %c0_27 = arith.constant 0 : index
    %c0_28 = arith.constant 0 : index
    %41 = vector.load %arg4[%c2_26, %c0_27, %c0_28] : memref<3x128x128xf32, #tpu.memory_space<vmem>>, vector<1x128x128xf32>
    %42 = vector.shape_cast %41 : vector<1x128x128xf32> to vector<128x128xf32>
    %cst_29 = arith.constant dense<0.000000e+00> : vector<16x128xf32>
    %43 = tpu.matmul %34, %42, %cst_29 {dimension_numbers = #tpu.dot_dimension_numbers<[1], [0], [0], [1], [0, 0, 1, 1], [], []>} : vector<16x128xf32>, vector<128x128xf32>, vector<16x128xf32> -> vector<16x128xf32>
    %cst_30 = arith.constant dense<0.000000e+00> : vector<16x128xf32>
    %44 = tpu.matmul %8, %37, %cst_30 {dimension_numbers = #tpu.dot_dimension_numbers<[1], [0], [0], [1], [0, 0, 1, 1], [], []>} : vector<16x16xf32>, vector<16x128xf32>, vector<16x128xf32> -> vector<16x128xf32>
    %45 = arith.addf %44, %40 : vector<16x128xf32>
    %cst_31 = arith.constant dense<0.000000e+00> : vector<16x128xf32>
    %46 = tpu.matmul %13, %43, %cst_31 {dimension_numbers = #tpu.dot_dimension_numbers<[1], [0], [0], [1], [0, 0, 1, 1], [], []>} : vector<16x16xf32>, vector<16x128xf32>, vector<16x128xf32> -> vector<16x128xf32>
    %47 = arith.addf %45, %46 : vector<16x128xf32>
    %c0_32 = arith.constant 0 : index
    %c0_33 = arith.constant 0 : index
    %48 = vector.load %arg5[%c0_32, %c0_33] : memref<1x128xf32, #tpu.memory_space<vmem>>, vector<1x128xf32>
    %49 = vector.broadcast %48 : vector<1x128xf32> to vector<16x128xf32>
    %50 = arith.addf %47, %49 : vector<16x128xf32>
    %cst_34 = arith.constant 0.000000e+00 : f32
    %51 = vector.broadcast %cst_34 : f32 to vector<16x128xf32>
    %52 = arith.cmpf oge, %50, %51 : vector<16x128xf32>
    %cst_35 = arith.constant 2.000000e-01 : f32
    %53 = vector.broadcast %cst_35 : f32 to vector<16x128xf32>
    %54 = arith.mulf %53, %50 : vector<16x128xf32>
    %55 = arith.select %52, %50, %54 : vector<16x128xi1>, vector<16x128xf32>
    %56 = vector.shape_cast %55 : vector<16x128xf32> to vector<1x16x128xf32>
    %c0_36 = arith.constant 0 : index
    %c0_37 = arith.constant 0 : index
    %c0_38 = arith.constant 0 : index
    %57 = vector.load %arg6[%c0_36, %c0_37, %c0_38] : memref<1x16x128xf32, #tpu.memory_space<vmem>>, vector<1x16x128xf32>
    tpu.vector_store %arg6[%c0_36, %c0_37, %c0_38], %56 {strides = array<i32>} : memref<1x16x128xf32, #tpu.memory_space<vmem>>, vector<1x16x128xf32>,
    return
  }
  func.func @transform_0(%arg0: i32) -> (i32, i32, i32) {
    %c0_i32 = arith.constant 0 : i32
    %c0_i32_0 = arith.constant 0 : i32
    %c0_i32_1 = arith.constant 0 : i32
    return %arg0, %c0_i32, %c0_i32_0 : i32, i32, i32
  }
  func.func @transform_1(%arg0: i32) -> (i32, i32, i32) {
    %c0_i32 = arith.constant 0 : i32
    %c0_i32_0 = arith.constant 0 : i32
    %c0_i32_1 = arith.constant 0 : i32
    %c0_i32_2 = arith.constant 0 : i32
    return %c0_i32, %c0_i32_0, %c0_i32_1 : i32, i32, i32
  }
  func.func @transform_2(%arg0: i32) -> (i32, i32) {
    %c0_i32 = arith.constant 0 : i32
    %c0_i32_0 = arith.constant 0 : i32
    %c0_i32_1 = arith.constant 0 : i32
    return %c0_i32, %c0_i32_0 : i32, i32
  }
  func.func @transform_3(%arg0: i32) -> (i32, i32, i32) {
    %c0_i32 = arith.constant 0 : i32
    %c0_i32_0 = arith.constant 0 : i32
    %c0_i32_1 = arith.constant 0 : i32
    %c0_i32_2 = arith.constant 0 : i32
    return %c0_i32, %c0_i32_0, %c0_i32_1 : i32, i32, i32
  }
  func.func @transform_4(%arg0: i32) -> (i32, i32) {
    %c0_i32 = arith.constant 0 : i32
    %c0_i32_0 = arith.constant 0 : i32
    %c0_i32_1 = arith.constant 0 : i32
    return %c0_i32, %c0_i32_0 : i32, i32
  }
  func.func @transform_5(%arg0: i32) -> (i32, i32, i32) {
    %c0_i32 = arith.constant 0 : i32
    %c0_i32_0 = arith.constant 0 : i32
    %c0_i32_1 = arith.constant 0 : i32
    return %arg0, %c0_i32, %c0_i32_0 : i32, i32, i32
  }
}

</mosaic_0001>

<llo_original>
// kernel: tpu_custom_call.1
$region0: #{tpu_custom_call.1}
  #allocation0 [shape = 'u32[]', space=smem, size = 0x4, offset = 0x4, fixed_abs, tag = 'smem constant byte address 0x4 - core index']
  #allocation1 [shape = 'u32[144,128]{1,0:T(1,128)}', space=vmem, size = 0x12000, scoped, tag = 'internal scratch']
  %s0 = inlined_call_operand.hbm [shape: f32[2,16,64], index: 0, kind: input, shape index: {}]
  %s1 = inlined_call_operand.hbm [shape: f32[3,64,128], index: 1, kind: input, shape index: {}]
  %s2 = inlined_call_operand.vmem [shape: f32[1,128], index: 2, kind: input, shape index: {}]
  %s3 = inlined_call_operand.hbm [shape: f32[3,128,128], index: 3, kind: input, shape index: {}]
  %s4 = inlined_call_operand.vmem [shape: f32[1,128], index: 4, kind: input, shape index: {}]
  %s5 = inlined_call_operand.hbm [shape: f32[2,16,128], index: 5, kind: output, shape index: {}]
  %s6 = sld [smem:[#allocation0]]
  $region65: #{tpu_custom_call.1} parent=0
    _
  %s8 = ssub.s32 1, %s6
  %s9 = scalar_select 0, %s8, %s6
  $region1: #{tpu_custom_call.1} parent=0
    #allocation2 [shape = 'u8[16384]{0}', space=vmem, size = 0x4000, scoped, tag = 'input window, operand 0']
    #allocation3 [shape = 's32[2]{0}', space=sflag, size = 0x8, scoped, tag = 'scoped memory for tpu_custom_call.1']
    #allocation4 [shape = 's32[2]{0}', space=sflag, size = 0x8, scoped, tag = 'scoped memory for tpu_custom_call.1']
    #allocation5 [shape = 'u8[98304]{0}', space=vmem, size = 0x18000, scoped, tag = 'input window, operand 1, single buffered']
    #allocation6 [shape = 's32[1]{0}', space=sflag, size = 0x4, scoped, tag = 'scoped memory for tpu_custom_call.1']
    #allocation7 [shape = 'u8[196608]{0}', space=vmem, size = 0x30000, scoped, tag = 'input window, operand 3, single buffered']
    #allocation8 [shape = 'u8[16384]{0}', space=vmem, size = 0x4000, scoped, tag = 'output window, operand 0']
    %10 = vsyncpa [#allocation3], 0
    %s11 = scalar_lea.sflag [#allocation3], 1
    %12 = vsyncpa %s11, 0
    %13 = vsyncpa [#allocation6], 0
    %14 = vsyncpa [#allocation4], 0
    %s15 = scalar_lea.sflag [#allocation4], 1
    %16 = vsyncpa %s15, 0
    loop: start=0, step=1, limit=4
    $region2: #{tpu_custom_call.1} parent=1 // loop_pre_header
      _
    $region3: #{tpu_custom_call.1} parent=1 // loop_header
      %s18 = sphi 0, %s22
      %p19 = scmp.ge.s32.totalorder %s18, 4
      %s28 = sphi 0, %s30
      %s31 = sphi 0, %s28
      %s32 = sphi 0, %s31
      %s48 = sphi 0, %s32
      %s52 = sphi 0, %s52
      %s54 = sphi 0, %s52
      %s55 = sphi 0, %s54
      %s69 = sphi 0, %s55
      %s73 = sphi 0, %s73
      %s75 = sphi 0, %s73
      %s76 = sphi 0, %s75
      %s90 = sphi 0, %s76
      %s94 = sphi 0, %s94
      %s96 = sphi 0, %s94
      %s97 = sphi 0, %s96
      %s111 = sphi 0, %s97
      %s115 = sphi 0, %s115
      %s117 = sphi 0, %s115
      %s118 = sphi 0, %s117
      %s132 = sphi 0, %s118
      %s138 = sphi 0, %s140
      %s141 = sphi 0, %s138
      %s142 = sphi 0, %s141
      %s158 = sphi 0, %s142
    $region4: #{tpu_custom_call.1} parent=1 // loop_header_branch
      %21 = sbr.rel (%p19) target = $region8
    $region5: #{tpu_custom_call.1} parent=1 // loop_body
      %s23 = ssub.s32 %s18, 1
      %s24 = ssub.s32 %s18, 2
      %s25 = sadd.s32 %s18, 1
      %s26 = ssub.s32 %s18, %s25
      %p27 = scmp.eq.s32.totalorder %s26, 0
      %s29 = sadd.s32 %s28, 1
      %s30 = scalar_select %p27, %s28, %s29
      %p33 = pneg %p27
      %p34 = scmp.eq.s32.totalorder %s18, 1
      %p35 = por %p33, %p34
      %p36 = scmp.ne.s32.totalorder %s28, %s31
      %p37 = scmp.eq.s32.totalorder %s18, 0
      %p38 = por %p36, %p37
      %p39 = scmp.ne.s32.totalorder %s28, %s31
      %p40 = scmp.eq.s32.totalorder %s23, 1
      %p41 = por %p39, %p40
      %p42 = scmp.ne.s32.totalorder %s31, %s32
      %p43 = scmp.eq.s32.totalorder %s23, 0
      %p44 = por %p42, %p43
      %p45 = scmp.ne.s32.totalorder %s31, %s32
      %p46 = scmp.eq.s32.totalorder %s24, 1
      %p47 = por %p45, %p46
      %p49 = scmp.ne.s32.totalorder %s32, %s48
      %p50 = scmp.eq.s32.totalorder %s24, 0
      %p51 = por %p49, %p50
      %s53 = sadd.s32 %s52, 1
      %p56 = scmp.eq.s32.totalorder %s18, 1
      %p57 = scmp.ne.s32.totalorder %s52, %s54
      %p58 = scmp.eq.s32.totalorder %s18, 0
      %p59 = por %p57, %p58
      %p60 = scmp.ne.s32.totalorder %s52, %s54
      %p61 = scmp.eq.s32.totalorder %s23, 1
      %p62 = por %p60, %p61
      %p63 = scmp.ne.s32.totalorder %s54, %s55
      %p64 = scmp.eq.s32.totalorder %s23, 0
      %p65 = por %p63, %p64
      %p66 = scmp.ne.s32.totalorder %s54, %s55
      %p67 = scmp.eq.s32.totalorder %s24, 1
      %p68 = por %p66, %p67
      %p70 = scmp.ne.s32.totalorder %s55, %s69
      %p71 = scmp.eq.s32.totalorder %s24, 0
      %p72 = por %p70, %p71
      %s74 = sadd.s32 %s73, 1
      %p77 = scmp.eq.s32.totalorder %s18, 1
      %p78 = scmp.ne.s32.totalorder %s73, %s75
      %p79 = scmp.eq.s32.totalorder %s18, 0
      %p80 = por %p78, %p79
      %p81 = scmp.ne.s32.totalorder %s73, %s75
      %p82 = scmp.eq.s32.totalorder %s23, 1
      %p83 = por %p81, %p82
      %p84 = scmp.ne.s32.totalorder %s75, %s76
      %p85 = scmp.eq.s32.totalorder %s23, 0
      %p86 = por %p84, %p85
      %p87 = scmp.ne.s32.totalorder %s75, %s76
      %p88 = scmp.eq.s32.totalorder %s24, 1
      %p89 = por %p87, %p88
      %p91 = scmp.ne.s32.totalorder %s76, %s90
      %p92 = scmp.eq.s32.totalorder %s24, 0
      %p93 = por %p91, %p92
      %s95 = sadd.s32 %s94, 1
      %p98 = scmp.eq.s32.totalorder %s18, 1
      %p99 = scmp.ne.s32.totalorder %s94, %s96
      %p100 = scmp.eq.s32.totalorder %s18, 0
      %p101 = por %p99, %p100
      %p102 = scmp.ne.s32.totalorder %s94, %s96
      %p103 = scmp.eq.s32.totalorder %s23, 1
      %p104 = por %p102, %p103
      %p105 = scmp.ne.s32.totalorder %s96, %s97
      %p106 = scmp.eq.s32.totalorder %s23, 0
      %p107 = por %p105, %p106
      %p108 = scmp.ne.s32.totalorder %s96, %s97
      %p109 = scmp.eq.s32.totalorder %s24, 1
      %p110 = por %p108, %p109
      %p112 = scmp.ne.s32.totalorder %s97, %s111
      %p113 = scmp.eq.s32.totalorder %s24, 0
      %p114 = por %p112, %p113
      %s116 = sadd.s32 %s115, 1
      %p119 = scmp.eq.s32.totalorder %s18, 1
      %p120 = scmp.ne.s32.totalorder %s115, %s117
      %p121 = scmp.eq.s32.totalorder %s18, 0
      %p122 = por %p120, %p121
      %p123 = scmp.ne.s32.totalorder %s115, %s117
      %p124 = scmp.eq.s32.totalorder %s23, 1
      %p125 = por %p123, %p124
      %p126 = scmp.ne.s32.totalorder %s117, %s118
      %p127 = scmp.eq.s32.totalorder %s23, 0
      %p128 = por %p126, %p127
      %p129 = scmp.ne.s32.totalorder %s117, %s118
      %p130 = scmp.eq.s32.totalorder %s24, 1
      %p131 = por %p129, %p130
      %p133 = scmp.ne.s32.totalorder %s118, %s132
      %p134 = scmp.eq.s32.totalorder %s24, 0
      %p135 = por %p133, %p134
      %s136 = ssub.s32 %s18, %s25
      %p137 = scmp.eq.s32.totalorder %s136, 0
      %s139 = sadd.s32 %s138, 1
      %s140 = scalar_select %p137, %s138, %s139
      %p143 = pneg %p137
      %p144 = scmp.eq.s32.totalorder %s18, 1
      %p145 = por %p143, %p144
      %p146 = scmp.ne.s32.totalorder %s138, %s141
      %p147 = scmp.eq.s32.totalorder %s18, 0
      %p148 = por %p146, %p147
      %p149 = scmp.ne.s32.totalorder %s138, %s141
      %p150 = scmp.eq.s32.totalorder %s23, 1
      %p151 = por %p149, %p150
      %p152 = scmp.ne.s32.totalorder %s141, %s142
      %p153 = scmp.eq.s32.totalorder %s23, 0
      %p154 = por %p152, %p153
      %p155 = scmp.ne.s32.totalorder %s141, %s142
      %p156 = scmp.eq.s32.totalorder %s24, 1
      %p157 = por %p155, %p156
      %p159 = scmp.ne.s32.totalorder %s142, %s158
      %p160 = scmp.eq.s32.totalorder %s24, 0
      %p161 = por %p159, %p160
      %p162 = scmp.le.s32.totalorder 1, %s18
      %p163 = scmp.lt.s32.totalorder %s18, 3
      %p164 = pnand %p162, %p163
      %p165 = pneg %p164
      // Predicated region
      $region9: #{tpu_custom_call.1} parent=5 // pred_check
        _
      $region10: #{tpu_custom_call.1} parent=5 // pred_check_branch
        %167 = sbr.rel (%p164) target = $region12
      $region11: #{tpu_custom_call.1} parent=5 // pred_region
        %s168 = ssub.s32 %s18, 1
        // Predicated region
        $region13: #{tpu_custom_call.1} parent=11 // pred_check
          %p169 = pneg %p65
        $region14: #{tpu_custom_call.1} parent=11 // pred_check_branch
          %171 = sbr.rel (%p169) target = $region16
        $region15: #{tpu_custom_call.1} parent=11 // pred_region
          %s173 = ssub.s32 3072, 3072
          %174 = vsyncadd [#allocation6], %s173
          %s175 = sshll.u32 [#allocation5], 4
          %s176 = int_to_ptr.vmem [resolvable:$true] %s175
          %181 = dma.hbm_to_vmem [thread:$0]  %s1, 3072, %s176, [#allocation6], 128, 128, 8
        $region16: #{tpu_custom_call.1} parent=11 // pred_fallthru
          _
        // Predicated region
        $region17: #{tpu_custom_call.1} parent=11 // pred_check
          %p182 = pneg %p86
        $region18: #{tpu_custom_call.1} parent=11 // pred_check_branch
          %184 = sbr.rel (%p182) target = $region20
        $region19: #{tpu_custom_call.1} parent=11 // pred_region
          _
        $region20: #{tpu_custom_call.1} parent=11 // pred_fallthru
          _
        // Predicated region
        $region21: #{tpu_custom_call.1} parent=11 // pred_check
          %p185 = pneg %p107
        $region22: #{tpu_custom_call.1} parent=11 // pred_check_branch
          %187 = sbr.rel (%p185) target = $region24
        $region23: #{tpu_custom_call.1} parent=11 // pred_region
          %s189 = ssub.s32 6144, 6144
          %190 = vsyncadd [#allocation6], %s189
          %s191 = sshll.u32 [#allocation7], 4
          %s192 = int_to_ptr.vmem [resolvable:$true] %s191
          %197 = dma.hbm_to_vmem [thread:$0]  %s3, 6144, %s192, [#allocation6], 128, 128, 8
        $region24: #{tpu_custom_call.1} parent=11 // pred_fallthru
          _
        // Predicated region
        $region25: #{tpu_custom_call.1} parent=11 // pred_check
          %p198 = pneg %p128
        $region26: #{tpu_custom_call.1} parent=11 // pred_check_branch
          %200 = sbr.rel (%p198) target = $region28
        $region27: #{tpu_custom_call.1} parent=11 // pred_region
          _
        $region28: #{tpu_custom_call.1} parent=11 // pred_fallthru
          _
      $region12: #{tpu_custom_call.1} parent=5 // pred_fallthru
        _
      %p201 = scmp.lt.s32.totalorder %s18, 2
      // Predicated region
      $region29: #{tpu_custom_call.1} parent=5 // pred_check
        %p202 = pneg %p201
      $region30: #{tpu_custom_call.1} parent=5 // pred_check_branch
        %204 = sbr.rel (%p202) target = $region32
      $region31: #{tpu_custom_call.1} parent=5 // pred_region
        // Predicated region
        $region33: #{tpu_custom_call.1} parent=31 // pred_check
          %p205 = pneg %p38
        $region34: #{tpu_custom_call.1} parent=31 // pred_check_branch
          %207 = sbr.rel (%p205) target = $region36
        $region35: #{tpu_custom_call.1} parent=31 // pred_region
          %s208 = sand.u32 %s28, 1
          %s209 = scalar_lea.sflag [#allocation3], %s208
          %s210 = sand.u32 %s28, 1
          %s211 = smul.addr %s210, 16
          %s212 = scalar_lea.vmem [#allocation2], %s211
          %s214 = ssub.s32 256, 256
          %215 = vsyncadd %s209, %s214
          %s216 = smul.addr %s18, 2
          %s217 = smul.addr %s216, 128
          %s218 = scalar_lea.hbm %s0, %s217
          %s219 = sshll.u32 %s212, 4
          %s220 = int_to_ptr.vmem [resolvable:$true] %s219
          %225 = dma.hbm_to_vmem [thread:$0]  %s218, 256, %s220, %s209, 128, 128, 8
        $region36: #{tpu_custom_call.1} parent=31 // pred_fallthru
          _
      $region32: #{tpu_custom_call.1} parent=5 // pred_fallthru
        _
      %p226 = scmp.le.s32.totalorder 1, %s18
      %p227 = scmp.lt.s32.totalorder %s18, 3
      %p228 = pnand %p226, %p227
      %p229 = pneg %p228
      // Predicated region
      $region37: #{tpu_custom_call.1} parent=5 // pred_check
        _
      $region38: #{tpu_custom_call.1} parent=5 // pred_check_branch
        %231 = sbr.rel (%p228) target = $region40
      $region39: #{tpu_custom_call.1} parent=5 // pred_region
        %s232 = ssub.s32 %s18, 1
        %s233 = sand.u32 %s31, 1
        %s234 = scalar_lea.sflag [#allocation3], %s233
        %s235 = sand.u32 %s31, 1
        %s236 = smul.addr %s235, 16
        %s237 = scalar_lea.vmem [#allocation2], %s236
        // Predicated region
        $region41: #{tpu_custom_call.1} parent=39 // pred_check
          %p238 = pneg %p44
        $region42: #{tpu_custom_call.1} parent=39 // pred_check_branch
          %240 = sbr.rel (%p238) target = $region44
        $region43: #{tpu_custom_call.1} parent=39 // pred_region
          %241 = dma.done %s234, 256
        $region44: #{tpu_custom_call.1} parent=39 // pred_fallthru
          _
        // Predicated region
        $region45: #{tpu_custom_call.1} parent=39 // pred_check
          %p242 = pneg %p65
        $region46: #{tpu_custom_call.1} parent=39 // pred_check_branch
          %244 = sbr.rel (%p242) target = $region48
        $region47: #{tpu_custom_call.1} parent=39 // pred_region
          %245 = dma.done [#allocation6], 3072
        $region48: #{tpu_custom_call.1} parent=39 // pred_fallthru
          _
        // Predicated region
        $region49: #{tpu_custom_call.1} parent=39 // pred_check
          %p246 = pneg %p107
        $region50: #{tpu_custom_call.1} parent=39 // pred_check_branch
          %248 = sbr.rel (%p246) target = $region52
        $region51: #{tpu_custom_call.1} parent=39 // pred_region
          %249 = dma.done [#allocation6], 6144
        $region52: #{tpu_custom_call.1} parent=39 // pred_fallthru
          _
        %s250 = sand.u32 %s31, 1
        %s251 = scalar_lea.sflag [#allocation3], %s250
        %s252 = sand.u32 %s31, 1
        %s253 = smul.addr %s252, 16
        %s254 = scalar_lea.vmem [#allocation2], %s253
        %p255 = pneg %p44
        %p256 = pneg %p41
        %p257 = pneg %p65
        %p258 = pneg %p62
        %p259 = pneg %p86
        %p260 = pneg %p83
        %p261 = pneg %p107
        %p262 = pneg %p104
        %p263 = pneg %p128
        %p264 = pneg %p125
        %p265 = pneg %p154
        %p266 = pneg %p151
        %s267 = sand.u32 %s141, 1
        %s268 = scalar_lea.sflag [#allocation4], %s267
        %s269 = sand.u32 %s141, 1
        %s270 = smul.addr %s269, 16
        %s271 = scalar_lea.vmem [#allocation8], %s270
        %v272 = vld [vmem:[%s237] sm:$0xff]
        %v273 = vld [vmem:[%s237 + $0x8] sm:$0xff]
        %v274 = vlaneseq
        %v275 = vshrl.u32 %v274, 7
        %v276 = vadd.s32 %v275, 8
        %v277 = vlaneseq
        %v278 = vand.u32 %v277, 127
        %v279 = vsub.s32 %v275, 1
        %v280 = vsub.s32 %v276, 1
        %vm281 = vcmp.eq.s32.totalorder %v278, %v279
        %vm282 = vcmp.eq.s32.totalorder %v278, %v280
        %v283 = vsel %vm281, 1, 0
        %v284 = vsel %vm282, 1, 0
        %v285 = vcvt.s32.f32 %v283
        %v286 = vcvt.s32.f32 %v284
        %v287 = vadd.s32 %v275, 1
        %v288 = vadd.s32 %v276, 1
        %vm289 = vcmp.eq.s32.totalorder %v278, %v287
        %vm290 = vcmp.eq.s32.totalorder %v278, %v288
        %v291 = vsel %vm289, 1, 0
        %v292 = vsel %vm290, 1, 0
        %v293 = vcvt.s32.f32 %v291
        %v294 = vcvt.s32.f32 %v292
        %v295 = vld [vmem:[#allocation5] sm:$0xff]
        %v296 = vld [vmem:[#allocation5 + $0x8] sm:$0xff]
        %v297 = vld [vmem:[#allocation5 + $0x10] sm:$0xff]
        %v298 = vld [vmem:[#allocation5 + $0x18] sm:$0xff]
        %v299 = vld [vmem:[#allocation5 + $0x20] sm:$0xff]
        %v300 = vld [vmem:[#allocation5 + $0x28] sm:$0xff]
        %v301 = vld [vmem:[#allocation5 + $0x30] sm:$0xff]
        %v302 = vld [vmem:[#allocation5 + $0x38] sm:$0xff]
        %vm303 = vcmask 523264
        %v305 = vsel %vm303, %v272, 0
        %v308 = vsel %vm303, %v273, 0
        %310 = vmatprep.subr.mxu0 0.0
        %311 = vmatpush1.msra.mxu0 %v295
        %312 = vmatprep.subr.mxu0 0.0
        %313 = vmatpush1.msra.mxu0 %v296
        %314 = vmatprep.subr.mxu0 0.0
        %315 = vmatpush1.msra.mxu0 %v297
        %316 = vmatprep.subr.mxu0 0.0
        %317 = vmatpush1.msra.mxu0 %v298
        %318 = vmatprep.subr.mxu0 0.0
        %319 = vmatpush1.msra.mxu0 %v299
        %320 = vmatprep.subr.mxu0 0.0
        %321 = vmatpush1.msra.mxu0 %v300
        %322 = vmatprep.subr.mxu0 0.0
        %323 = vmatpush1.msra.mxu0 %v301
        %324 = vmatprep.subr.mxu0 0.0
        %325 = vmatpush1.msra.mxu0 %v302
        %326 = vmatprep.subr.mxu0 0.0
        %327 = vmatpush1.msra.mxu0 0.0
        %328 = vmatprep.subr.mxu0 0.0
        %329 = vmatpush1.msra.mxu0 0.0
        %330 = vmatprep.subr.mxu0 0.0
        %331 = vmatpush1.msra.mxu0 0.0
        %332 = vmatprep.subr.mxu0 0.0
        %333 = vmatpush1.msra.mxu0 0.0
        %334 = vmatprep.subr.mxu0 0.0
        %335 = vmatpush1.msra.mxu0 0.0
        %336 = vmatprep.subr.mxu0 0.0
        %337 = vmatpush1.msra.mxu0 0.0
        %338 = vmatprep.subr.mxu0 0.0
        %339 = vmatpush1.msra.mxu0 0.0
        %340 = vmatprep.subr.mxu0 0.0
        %341 = vmatpush1.msra.mxu0 0.0
        %342 = vmatprep.subr.mxu0 0.0
        %343 = vmatpush1.msra.mxu0 0.0
        %344 = vmatprep.subr.mxu0 0.0
        %345 = vmatpush1.msra.mxu0 0.0
        %346 = vmatprep.subr.mxu0 0.0
        %347 = vmatpush1.msra.mxu0 0.0
        %348 = vmatprep.subr.mxu0 0.0
        %349 = vmatpush1.msra.mxu0 0.0
        %350 = vmatprep.subr.mxu0 0.0
        %351 = vmatpush1.msra.mxu0 0.0
        %352 = vmatprep.subr.mxu0 0.0
        %353 = vmatpush1.msra.mxu0 0.0
        %354 = vmatprep.subr.mxu0 0.0
        %355 = vmatpush1.msra.mxu0 0.0
        %356 = vmatprep.subr.mxu0 0.0
        %357 = vmatpush1.msra.mxu0 0.0
        %358 = vmatprep.subr.mxu0 0.0
        %359 = vmatpush1.msra.mxu0 0.0
        %360 = vmatprep.subr.mxu0 0.0
        %361 = vmatpush1.msra.mxu0 0.0
        %362 = vmatprep.subr.mxu0 0.0
        %363 = vmatpush1.msra.mxu0 0.0
        %364 = vmatprep.subr.mxu0 0.0
        %365 = vmatpush1.msra.mxu0 0.0
        %366 = vmatprep.subr.mxu0 0.0
        %367 = vmatpush1.msra.mxu0 0.0
        %368 = vmatprep.subr.mxu0 0.0
        %369 = vmatpush1.msra.mxu0 0.0
        %370 = vmatprep.subr.mxu0 0.0
        %371 = vmatpush1.msra.mxu0 0.0
        %372 = vmatprep.subr.mxu0 0.0
        %373 = vmatpush1.msra.mxu0 0.0
        %374 = vmatprep.mubr.f32.mxu0 0.0
        %375 = vmatmul.mubr.f32.gmra.mrb[0].mxu0 %v305
        %v376 = vpop.f32.mrb[0].mxu0
        %v377 = vadd.f32 0.0, %v376
        %v378 = vpop.f32.mrb[0].mxu0
        %379 = vmatprep.mubr.f32.mxu0 0.0
        %380 = vmatmul.mubr.f32.gmra.mrb[0].mxu0 %v308
        %v381 = vpop.f32.mrb[0].mxu0
        %v382 = vadd.f32 0.0, %v381
        %v383 = vpop.f32.mrb[0].mxu0
        %384 = vdwg.mxu0
        %s385 = scalar_lea.vmem [#allocation5], 64
        %v386 = vld [vmem:[%s385] sm:$0xff]
        %v387 = vld [vmem:[%s385 + $0x8] sm:$0xff]
        %v388 = vld [vmem:[%s385 + $0x10] sm:$0xff]
        %v389 = vld [vmem:[%s385 + $0x18] sm:$0xff]
        %v390 = vld [vmem:[%s385 + $0x20] sm:$0xff]
        %v391 = vld [vmem:[%s385 + $0x28] sm:$0xff]
        %v392 = vld [vmem:[%s385 + $0x30] sm:$0xff]
        %v393 = vld [vmem:[%s385 + $0x38] sm:$0xff]
        %394 = vmatprep.subr.mxu0 0.0
        %395 = vmatpush1.msra.mxu0 %v386
        %396 = vmatprep.subr.mxu0 0.0
        %397 = vmatpush1.msra.mxu0 %v387
        %398 = vmatprep.subr.mxu0 0.0
        %399 = vmatpush1.msra.mxu0 %v388
        %400 = vmatprep.subr.mxu0 0.0
        %401 = vmatpush1.msra.mxu0 %v389
        %402 = vmatprep.subr.mxu0 0.0
        %403 = vmatpush1.msra.mxu0 %v390
        %404 = vmatprep.subr.mxu0 0.0
        %405 = vmatpush1.msra.mxu0 %v391
        %406 = vmatprep.subr.mxu0 0.0
        %407 = vmatpush1.msra.mxu0 %v392
        %408 = vmatprep.subr.mxu0 0.0
        %409 = vmatpush1.msra.mxu0 %v393
        %410 = vmatprep.subr.mxu0 0.0
        %411 = vmatpush1.msra.mxu0 0.0
        %412 = vmatprep.subr.mxu0 0.0
        %413 = vmatpush1.msra.mxu0 0.0
        %414 = vmatprep.subr.mxu0 0.0
        %415 = vmatpush1.msra.mxu0 0.0
        %416 = vmatprep.subr.mxu0 0.0
        %417 = vmatpush1.msra.mxu0 0.0
        %418 = vmatprep.subr.mxu0 0.0
        %419 = vmatpush1.msra.mxu0 0.0
        %420 = vmatprep.subr.mxu0 0.0
        %421 = vmatpush1.msra.mxu0 0.0
        %422 = vmatprep.subr.mxu0 0.0
        %423 = vmatpush1.msra.mxu0 0.0
        %424 = vmatprep.subr.mxu0 0.0
        %425 = vmatpush1.msra.mxu0 0.0
        %426 = vmatprep.subr.mxu0 0.0
        %427 = vmatpush1.msra.mxu0 0.0
        %428 = vmatprep.subr.mxu0 0.0
        %429 = vmatpush1.msra.mxu0 0.0
        %430 = vmatprep.subr.mxu0 0.0
        %431 = vmatpush1.msra.mxu0 0.0
        %432 = vmatprep.subr.mxu0 0.0
        %433 = vmatpush1.msra.mxu0 0.0
        %434 = vmatprep.subr.mxu0 0.0
        %435 = vmatpush1.msra.mxu0 0.0
        %436 = vmatprep.subr.mxu0 0.0
        %437 = vmatpush1.msra.mxu0 0.0
        %438 = vmatprep.subr.mxu0 0.0
        %439 = vmatpush1.msra.mxu0 0.0
        %440 = vmatprep.subr.mxu0 0.0
        %441 = vmatpush1.msra.mxu0 0.0
        %442 = vmatprep.subr.mxu0 0.0
        %443 = vmatpush1.msra.mxu0 0.0
        %444 = vmatprep.subr.mxu0 0.0
        %445 = vmatpush1.msra.mxu0 0.0
        %446 = vmatprep.subr.mxu0 0.0
        %447 = vmatpush1.msra.mxu0 0.0
        %448 = vmatprep.subr.mxu0 0.0
        %449 = vmatpush1.msra.mxu0 0.0
        %450 = vmatprep.subr.mxu0 0.0
        %451 = vmatpush1.msra.mxu0 0.0
        %452 = vmatprep.subr.mxu0 0.0
        %453 = vmatpush1.msra.mxu0 0.0
        %454 = vmatprep.subr.mxu0 0.0
        %455 = vmatpush1.msra.mxu0 0.0
        %456 = vmatprep.subr.mxu0 0.0
        %457 = vmatpush1.msra.mxu0 0.0
        %458 = vmatprep.mubr.f32.mxu0 0.0
        %459 = vmatmul.mubr.f32.gmra.mrb[0].mxu0 %v305
        %v460 = vpop.f32.mrb[0].mxu0
        %v461 = vadd.f32 0.0, %v460
        %v462 = vpop.f32.mrb[0].mxu0
        %463 = vmatprep.mubr.f32.mxu0 0.0
        %464 = vmatmul.mubr.f32.gmra.mrb[0].mxu0 %v308
        %v465 = vpop.f32.mrb[0].mxu0
        %v466 = vadd.f32 0.0, %v465
        %v467 = vpop.f32.mrb[0].mxu0
        %468 = vdwg.mxu0
        %s469 = scalar_lea.vmem [#allocation5], 128
        %v470 = vld [vmem:[%s469] sm:$0xff]
        %v471 = vld [vmem:[%s469 + $0x8] sm:$0xff]
        %v472 = vld [vmem:[%s469 + $0x10] sm:$0xff]
        %v473 = vld [vmem:[%s469 + $0x18] sm:$0xff]
        %v474 = vld [vmem:[%s469 + $0x20] sm:$0xff]
        %v475 = vld [vmem:[%s469 + $0x28] sm:$0xff]
        %v476 = vld [vmem:[%s469 + $0x30] sm:$0xff]
        %v477 = vld [vmem:[%s469 + $0x38] sm:$0xff]
        %478 = vmatprep.subr.mxu0 0.0
        %479 = vmatpush1.msra.mxu0 %v470
        %480 = vmatprep.subr.mxu0 0.0
        %481 = vmatpush1.msra.mxu0 %v471
        %482 = vmatprep.subr.mxu0 0.0
        %483 = vmatpush1.msra.mxu0 %v472
        %484 = vmatprep.subr.mxu0 0.0
        %485 = vmatpush1.msra.mxu0 %v473
        %486 = vmatprep.subr.mxu0 0.0
        %487 = vmatpush1.msra.mxu0 %v474
        %488 = vmatprep.subr.mxu0 0.0
        %489 = vmatpush1.msra.mxu0 %v475
        %490 = vmatprep.subr.mxu0 0.0
        %491 = vmatpush1.msra.mxu0 %v476
        %492 = vmatprep.subr.mxu0 0.0
        %493 = vmatpush1.msra.mxu0 %v477
        %494 = vmatprep.subr.mxu0 0.0
        %495 = vmatpush1.msra.mxu0 0.0
        %496 = vmatprep.subr.mxu0 0.0
        %497 = vmatpush1.msra.mxu0 0.0
        %498 = vmatprep.subr.mxu0 0.0
        %499 = vmatpush1.msra.mxu0 0.0
        %500 = vmatprep.subr.mxu0 0.0
        %501 = vmatpush1.msra.mxu0 0.0
        %502 = vmatprep.subr.mxu0 0.0
        %503 = vmatpush1.msra.mxu0 0.0
        %504 = vmatprep.subr.mxu0 0.0
        %505 = vmatpush1.msra.mxu0 0.0
        %506 = vmatprep.subr.mxu0 0.0
        %507 = vmatpush1.msra.mxu0 0.0
        %508 = vmatprep.subr.mxu0 0.0
        %509 = vmatpush1.msra.mxu0 0.0
        %510 = vmatprep.subr.mxu0 0.0
        %511 = vmatpush1.msra.mxu0 0.0
        %512 = vmatprep.subr.mxu0 0.0
        %513 = vmatpush1.msra.mxu0 0.0
        %514 = vmatprep.subr.mxu0 0.0
        %515 = vmatpush1.msra.mxu0 0.0
        %516 = vmatprep.subr.mxu0 0.0
        %517 = vmatpush1.msra.mxu0 0.0
        %518 = vmatprep.subr.mxu0 0.0
        %519 = vmatpush1.msra.mxu0 0.0
        %520 = vmatprep.subr.mxu0 0.0
        %521 = vmatpush1.msra.mxu0 0.0
        %522 = vmatprep.subr.mxu0 0.0
        %523 = vmatpush1.msra.mxu0 0.0
        %524 = vmatprep.subr.mxu0 0.0
        %525 = vmatpush1.msra.mxu0 0.0
        %526 = vmatprep.subr.mxu0 0.0
        %527 = vmatpush1.msra.mxu0 0.0
        %528 = vmatprep.subr.mxu0 0.0
        %529 = vmatpush1.msra.mxu0 0.0
        %530 = vmatprep.subr.mxu0 0.0
        %531 = vmatpush1.msra.mxu0 0.0
        %532 = vmatprep.subr.mxu0 0.0
        %533 = vmatpush1.msra.mxu0 0.0
        %534 = vmatprep.subr.mxu0 0.0
        %535 = vmatpush1.msra.mxu0 0.0
        %536 = vmatprep.subr.mxu0 0.0
        %537 = vmatpush1.msra.mxu0 0.0
        %538 = vmatprep.subr.mxu0 0.0
        %539 = vmatpush1.msra.mxu0 0.0
        %540 = vmatprep.subr.mxu0 0.0
        %541 = vmatpush1.msra.mxu0 0.0
        %542 = vmatprep.mubr.f32.mxu0 0.0
        %543 = vmatmul.mubr.f32.gmra.mrb[0].mxu0 %v305
        %v544 = vpop.f32.mrb[0].mxu0
        %v545 = vadd.f32 0.0, %v544
        %v546 = vpop.f32.mrb[0].mxu0
        %547 = vmatprep.mubr.f32.mxu0 0.0
        %548 = vmatmul.mubr.f32.gmra.mrb[0].mxu0 %v308
        %v549 = vpop.f32.mrb[0].mxu0
        %v550 = vadd.f32 0.0, %v549
        %v551 = vpop.f32.mrb[0].mxu0
        %552 = vdwg.mxu0
        %vm553 = vcmask 130048
        %v555 = vsel %vm553, %v285, 0
        %v558 = vsel %vm553, %v286, 0
        %560 = vmatprep.subr.mxu0 0.0
        %561 = vmatpush1.msra.mxu0 %v377
        %562 = vmatprep.subr.mxu0 0.0
        %563 = vmatpush1.msra.mxu0 %v382
        %564 = vmatprep.subr.mxu0 0.0
        %565 = vmatpush1.msra.mxu0 0.0
        %566 = vmatprep.subr.mxu0 0.0
        %567 = vmatpush1.msra.mxu0 0.0
        %568 = vmatprep.subr.mxu0 0.0
        %569 = vmatpush1.msra.mxu0 0.0
        %570 = vmatprep.subr.mxu0 0.0
        %571 = vmatpush1.msra.mxu0 0.0
        %572 = vmatprep.subr.mxu0 0.0
        %573 = vmatpush1.msra.mxu0 0.0
        %574 = vmatprep.subr.mxu0 0.0
        %575 = vmatpush1.msra.mxu0 0.0
        %576 = vmatprep.subr.mxu0 0.0
        %577 = vmatpush1.msra.mxu0 0.0
        %578 = vmatprep.subr.mxu0 0.0
        %579 = vmatpush1.msra.mxu0 0.0
        %580 = vmatprep.subr.mxu0 0.0
        %581 = vmatpush1.msra.mxu0 0.0
        %582 = vmatprep.subr.mxu0 0.0
        %583 = vmatpush1.msra.mxu0 0.0
        %584 = vmatprep.subr.mxu0 0.0
        %585 = vmatpush1.msra.mxu0 0.0
        %586 = vmatprep.subr.mxu0 0.0
        %587 = vmatpush1.msra.mxu0 0.0
        %588 = vmatprep.subr.mxu0 0.0
        %589 = vmatpush1.msra.mxu0 0.0
        %590 = vmatprep.subr.mxu0 0.0
        %591 = vmatpush1.msra.mxu0 0.0
        %592 = vmatprep.subr.mxu0 0.0
        %593 = vmatpush1.msra.mxu0 0.0
        %594 = vmatprep.subr.mxu0 0.0
        %595 = vmatpush1.msra.mxu0 0.0
        %596 = vmatprep.subr.mxu0 0.0
        %597 = vmatpush1.msra.mxu0 0.0
        %598 = vmatprep.subr.mxu0 0.0
        %599 = vmatpush1.msra.mxu0 0.0
        %600 = vmatprep.subr.mxu0 0.0
        %601 = vmatpush1.msra.mxu0 0.0
        %602 = vmatprep.subr.mxu0 0.0
        %603 = vmatpush1.msra.mxu0 0.0
        %604 = vmatprep.subr.mxu0 0.0
        %605 = vmatpush1.msra.mxu0 0.0
        %606 = vmatprep.subr.mxu0 0.0
        %607 = vmatpush1.msra.mxu0 0.0
        %608 = vmatprep.subr.mxu0 0.0
        %609 = vmatpush1.msra.mxu0 0.0
        %610 = vmatprep.subr.mxu0 0.0
        %611 = vmatpush1.msra.mxu0 0.0
        %612 = vmatprep.subr.mxu0 0.0
        %613 = vmatpush1.msra.mxu0 0.0
        %614 = vmatprep.subr.mxu0 0.0
        %615 = vmatpush1.msra.mxu0 0.0
        %616 = vmatprep.subr.mxu0 0.0
        %617 = vmatpush1.msra.mxu0 0.0
        %618 = vmatprep.subr.mxu0 0.0
        %619 = vmatpush1.msra.mxu0 0.0
        %620 = vmatprep.subr.mxu0 0.0
        %621 = vmatpush1.msra.mxu0 0.0
        %622 = vmatprep.subr.mxu0 0.0
        %623 = vmatpush1.msra.mxu0 0.0
        %624 = vmatprep.mubr.f32.mxu0 0.0
        %625 = vmatmul.mubr.f32.gmra.mrb[0].mxu0 %v555
        %v626 = vpop.f32.mrb[0].mxu0
        %v627 = vadd.f32 %v461, %v626
        %v628 = vpop.f32.mrb[0].mxu0
        %629 = vmatprep.mubr.f32.mxu0 0.0
        %630 = vmatmul.mubr.f32.gmra.mrb[0].mxu0 %v558
        %v631 = vpop.f32.mrb[0].mxu0
        %v632 = vadd.f32 %v466, %v631
        %v633 = vpop.f32.mrb[0].mxu0
        %634 = vdwg.mxu0
        %v636 = vsel %vm553, %v293, 0
        %v639 = vsel %vm553, %v294, 0
        %641 = vmatprep.subr.mxu0 0.0
        %642 = vmatpush1.msra.mxu0 %v545
        %643 = vmatprep.subr.mxu0 0.0
        %644 = vmatpush1.msra.mxu0 %v550
        %645 = vmatprep.subr.mxu0 0.0
        %646 = vmatpush1.msra.mxu0 0.0
        %647 = vmatprep.subr.mxu0 0.0
        %648 = vmatpush1.msra.mxu0 0.0
        %649 = vmatprep.subr.mxu0 0.0
        %650 = vmatpush1.msra.mxu0 0.0
        %651 = vmatprep.subr.mxu0 0.0
        %652 = vmatpush1.msra.mxu0 0.0
        %653 = vmatprep.subr.mxu0 0.0
        %654 = vmatpush1.msra.mxu0 0.0
        %655 = vmatprep.subr.mxu0 0.0
        %656 = vmatpush1.msra.mxu0 0.0
        %657 = vmatprep.subr.mxu0 0.0
        %658 = vmatpush1.msra.mxu0 0.0
        %659 = vmatprep.subr.mxu0 0.0
        %660 = vmatpush1.msra.mxu0 0.0
        %661 = vmatprep.subr.mxu0 0.0
        %662 = vmatpush1.msra.mxu0 0.0
        %663 = vmatprep.subr.mxu0 0.0
        %664 = vmatpush1.msra.mxu0 0.0
        %665 = vmatprep.subr.mxu0 0.0
        %666 = vmatpush1.msra.mxu0 0.0
        %667 = vmatprep.subr.mxu0 0.0
        %668 = vmatpush1.msra.mxu0 0.0
        %669 = vmatprep.subr.mxu0 0.0
        %670 = vmatpush1.msra.mxu0 0.0
        %671 = vmatprep.subr.mxu0 0.0
        %672 = vmatpush1.msra.mxu0 0.0
        %673 = vmatprep.subr.mxu0 0.0
        %674 = vmatpush1.msra.mxu0 0.0
        %675 = vmatprep.subr.mxu0 0.0
        %676 = vmatpush1.msra.mxu0 0.0
        %677 = vmatprep.subr.mxu0 0.0
        %678 = vmatpush1.msra.mxu0 0.0
        %679 = vmatprep.subr.mxu0 0.0
        %680 = vmatpush1.msra.mxu0 0.0
        %681 = vmatprep.subr.mxu0 0.0
        %682 = vmatpush1.msra.mxu0 0.0
        %683 = vmatprep.subr.mxu0 0.0
        %684 = vmatpush1.msra.mxu0 0.0
        %685 = vmatprep.subr.mxu0 0.0
        %686 = vmatpush1.msra.mxu0 0.0
        %687 = vmatprep.subr.mxu0 0.0
        %688 = vmatpush1.msra.mxu0 0.0
        %689 = vmatprep.subr.mxu0 0.0
        %690 = vmatpush1.msra.mxu0 0.0
        %691 = vmatprep.subr.mxu0 0.0
        %692 = vmatpush1.msra.mxu0 0.0
        %693 = vmatprep.subr.mxu0 0.0
        %694 = vmatpush1.msra.mxu0 0.0
        %695 = vmatprep.subr.mxu0 0.0
        %696 = vmatpush1.msra.mxu0 0.0
        %697 = vmatprep.subr.mxu0 0.0
        %698 = vmatpush1.msra.mxu0 0.0
        %699 = vmatprep.subr.mxu0 0.0
        %700 = vmatpush1.msra.mxu0 0.0
        %701 = vmatprep.subr.mxu0 0.0
        %702 = vmatpush1.msra.mxu0 0.0
        %703 = vmatprep.subr.mxu0 0.0
        %704 = vmatpush1.msra.mxu0 0.0
        %705 = vmatprep.mubr.f32.mxu0 0.0
        %706 = vmatmul.mubr.f32.gmra.mrb[0].mxu0 %v636
        %v707 = vpop.f32.mrb[0].mxu0
        %v708 = vadd.f32 0.0, %v707
        %v709 = vpop.f32.mrb[0].mxu0
        %710 = vmatprep.mubr.f32.mxu0 0.0
        %711 = vmatmul.mubr.f32.gmra.mrb[0].mxu0 %v639
        %v712 = vpop.f32.mrb[0].mxu0
        %v713 = vadd.f32 0.0, %v712
        %v714 = vpop.f32.mrb[0].mxu0
        %715 = vdwg.mxu0
        %v716 = vadd.f32 %v627, %v708
        %v717 = vadd.f32 %v632, %v713
        %v718 = vld [vmem:[%s2] sm:$0x1]
        %v720 = vlaneseq
        %v721 = vshrl.u32 %v720, 7
        %v722 = vsub.s32 0, %v721
        %v723 = vrot.slane %v718, %v722
        %v725 = vadd.f32 %v716, %v723
        %v726 = vadd.f32 %v717, %v723
        %vm727 = vcmp.ge.f32.partialorder %v725, 0.0
        %vm728 = vcmp.ge.f32.partialorder %v726, 0.0
        %v729 = vmul.f32 %v725, 0.2
        %v730 = vmul.f32 %v726, 0.2
        %v731 = vsel %vm727, %v725, %v729
        %v732 = vsel %vm728, %v726, %v730
        %v733 = vld [vmem:[#allocation7] sm:$0xff]
        %v734 = vld [vmem:[#allocation7 + $0x8] sm:$0xff]
        %v735 = vld [vmem:[#allocation7 + $0x10] sm:$0xff]
        %v736 = vld [vmem:[#allocation7 + $0x18] sm:$0xff]
        %v737 = vld [vmem:[#allocation7 + $0x20] sm:$0xff]
        %v738 = vld [vmem:[#allocation7 + $0x28] sm:$0xff]
        %v739 = vld [vmem:[#allocation7 + $0x30] sm:$0xff]
        %v740 = vld [vmem:[#allocation7 + $0x38] sm:$0xff]
        %v741 = vld [vmem:[#allocation7 + $0x40] sm:$0xff]
        %v742 = vld [vmem:[#allocation7 + $0x48] sm:$0xff]
        %v743 = vld [vmem:[#allocation7 + $0x50] sm:$0xff]
        %v744 = vld [vmem:[#allocation7 + $0x58] sm:$0xff]
        %v745 = vld [vmem:[#allocation7 + $0x60] sm:$0xff]
        %v746 = vld [vmem:[#allocation7 + $0x68] sm:$0xff]
        %v747 = vld [vmem:[#allocation7 + $0x70] sm:$0xff]
        %v748 = vld [vmem:[#allocation7 + $0x78] sm:$0xff]
        %749 = vmatprep.subr.mxu0 0.0
        %750 = vmatpush1.msra.mxu0 %v733
        %751 = vmatprep.subr.mxu0 0.0
        %752 = vmatpush1.msra.mxu0 %v734
        %753 = vmatprep.subr.mxu0 0.0
        %754 = vmatpush1.msra.mxu0 %v735
        %755 = vmatprep.subr.mxu0 0.0
        %756 = vmatpush1.msra.mxu0 %v736
        %757 = vmatprep.subr.mxu0 0.0
        %758 = vmatpush1.msra.mxu0 %v737
        %759 = vmatprep.subr.mxu0 0.0
        %760 = vmatpush1.msra.mxu0 %v738
        %761 = vmatprep.subr.mxu0 0.0
        %762 = vmatpush1.msra.mxu0 %v739
        %763 = vmatprep.subr.mxu0 0.0
        %764 = vmatpush1.msra.mxu0 %v740
        %765 = vmatprep.subr.mxu0 0.0
        %766 = vmatpush1.msra.mxu0 %v741
        %767 = vmatprep.subr.mxu0 0.0
        %768 = vmatpush1.msra.mxu0 %v742
        %769 = vmatprep.subr.mxu0 0.0
        %770 = vmatpush1.msra.mxu0 %v743
        %771 = vmatprep.subr.mxu0 0.0
        %772 = vmatpush1.msra.mxu0 %v744
        %773 = vmatprep.subr.mxu0 0.0
        %774 = vmatpush1.msra.mxu0 %v745
        %775 = vmatprep.subr.mxu0 0.0
        %776 = vmatpush1.msra.mxu0 %v746
        %777 = vmatprep.subr.mxu0 0.0
        %778 = vmatpush1.msra.mxu0 %v747
        %779 = vmatprep.subr.mxu0 0.0
        %780 = vmatpush1.msra.mxu0 %v748
        %781 = vmatprep.subr.mxu0 0.0
        %782 = vmatpush1.msra.mxu0 0.0
        %783 = vmatprep.subr.mxu0 0.0
        %784 = vmatpush1.msra.mxu0 0.0
        %785 = vmatprep.subr.mxu0 0.0
        %786 = vmatpush1.msra.mxu0 0.0
        %787 = vmatprep.subr.mxu0 0.0
        %788 = vmatpush1.msra.mxu0 0.0
        %789 = vmatprep.subr.mxu0 0.0
        %790 = vmatpush1.msra.mxu0 0.0
        %791 = vmatprep.subr.mxu0 0.0
        %792 = vmatpush1.msra.mxu0 0.0
        %793 = vmatprep.subr.mxu0 0.0
        %794 = vmatpush1.msra.mxu0 0.0
        %795 = vmatprep.subr.mxu0 0.0
        %796 = vmatpush1.msra.mxu0 0.0
        %797 = vmatprep.subr.mxu0 0.0
        %798 = vmatpush1.msra.mxu0 0.0
        %799 = vmatprep.subr.mxu0 0.0
        %800 = vmatpush1.msra.mxu0 0.0
        %801 = vmatprep.subr.mxu0 0.0
        %802 = vmatpush1.msra.mxu0 0.0
        %803 = vmatprep.subr.mxu0 0.0
        %804 = vmatpush1.msra.mxu0 0.0
        %805 = vmatprep.subr.mxu0 0.0
        %806 = vmatpush1.msra.mxu0 0.0
        %807 = vmatprep.subr.mxu0 0.0
        %808 = vmatpush1.msra.mxu0 0.0
        %809 = vmatprep.subr.mxu0 0.0
        %810 = vmatpush1.msra.mxu0 0.0
        %811 = vmatprep.subr.mxu0 0.0
        %812 = vmatpush1.msra.mxu0 0.0
        %813 = vmatprep.mubr.f32.mxu0 0.0
        %814 = vmatmul.mubr.f32.gmra.mrb[0].mxu0 %v731
        %v815 = vpop.f32.mrb[0].mxu0
        %v816 = vadd.f32 0.0, %v815
        %v817 = vpop.f32.mrb[0].mxu0
        %818 = vmatprep.mubr.f32.mxu0 0.0
        %819 = vmatmul.mubr.f32.gmra.mrb[0].mxu0 %v732
        %v820 = vpop.f32.mrb[0].mxu0
        %v821 = vadd.f32 0.0, %v820
        %v822 = vpop.f32.mrb[0].mxu0
        %823 = vdwg.mxu0
        %s824 = scalar_lea.vmem [#allocation7], 128
        %v825 = vld [vmem:[%s824] sm:$0xff]
        %v826 = vld [vmem:[%s824 + $0x8] sm:$0xff]
        %v827 = vld [vmem:[%s824 + $0x10] sm:$0xff]
        %v828 = vld [vmem:[%s824 + $0x18] sm:$0xff]
        %v829 = vld [vmem:[%s824 + $0x20] sm:$0xff]
        %v830 = vld [vmem:[%s824 + $0x28] sm:$0xff]
        %v831 = vld [vmem:[%s824 + $0x30] sm:$0xff]
        %v832 = vld [vmem:[%s824 + $0x38] sm:$0xff]
        %v833 = vld [vmem:[%s824 + $0x40] sm:$0xff]
        %v834 = vld [vmem:[%s824 + $0x48] sm:$0xff]
        %v835 = vld [vmem:[%s824 + $0x50] sm:$0xff]
        %v836 = vld [vmem:[%s824 + $0x58] sm:$0xff]
        %v837 = vld [vmem:[%s824 + $0x60] sm:$0xff]
        %v838 = vld [vmem:[%s824 + $0x68] sm:$0xff]
        %v839 = vld [vmem:[%s824 + $0x70] sm:$0xff]
        %v840 = vld [vmem:[%s824 + $0x78] sm:$0xff]
        %841 = vmatprep.subr.mxu0 0.0
        %842 = vmatpush1.msra.mxu0 %v825
        %843 = vmatprep.subr.mxu0 0.0
        %844 = vmatpush1.msra.mxu0 %v826
        %845 = vmatprep.subr.mxu0 0.0
        %846 = vmatpush1.msra.mxu0 %v827
        %847 = vmatprep.subr.mxu0 0.0
        %848 = vmatpush1.msra.mxu0 %v828
        %849 = vmatprep.subr.mxu0 0.0
        %850 = vmatpush1.msra.mxu0 %v829
        %851 = vmatprep.subr.mxu0 0.0
        %852 = vmatpush1.msra.mxu0 %v830
        %853 = vmatprep.subr.mxu0 0.0
        %854 = vmatpush1.msra.mxu0 %v831
        %855 = vmatprep.subr.mxu0 0.0
        %856 = vmatpush1.msra.mxu0 %v832
        %857 = vmatprep.subr.mxu0 0.0
        %858 = vmatpush1.msra.mxu0 %v833
        %859 = vmatprep.subr.mxu0 0.0
        %860 = vmatpush1.msra.mxu0 %v834
        %861 = vmatprep.subr.mxu0 0.0
        %862 = vmatpush1.msra.mxu0 %v835
        %863 = vmatprep.subr.mxu0 0.0
        %864 = vmatpush1.msra.mxu0 %v836
        %865 = vmatprep.subr.mxu0 0.0
        %866 = vmatpush1.msra.mxu0 %v837
        %867 = vmatprep.subr.mxu0 0.0
        %868 = vmatpush1.msra.mxu0 %v838
        %869 = vmatprep.subr.mxu0 0.0
        %870 = vmatpush1.msra.mxu0 %v839
        %871 = vmatprep.subr.mxu0 0.0
        %872 = vmatpush1.msra.mxu0 %v840
        %873 = vmatprep.subr.mxu0 0.0
        %874 = vmatpush1.msra.mxu0 0.0
        %875 = vmatprep.subr.mxu0 0.0
        %876 = vmatpush1.msra.mxu0 0.0
        %877 = vmatprep.subr.mxu0 0.0
        %878 = vmatpush1.msra.mxu0 0.0
        %879 = vmatprep.subr.mxu0 0.0
        %880 = vmatpush1.msra.mxu0 0.0
        %881 = vmatprep.subr.mxu0 0.0
        %882 = vmatpush1.msra.mxu0 0.0
        %883 = vmatprep.subr.mxu0 0.0
        %884 = vmatpush1.msra.mxu0 0.0
        %885 = vmatprep.subr.mxu0 0.0
        %886 = vmatpush1.msra.mxu0 0.0
        %887 = vmatprep.subr.mxu0 0.0
        %888 = vmatpush1.msra.mxu0 0.0
        %889 = vmatprep.subr.mxu0 0.0
        %890 = vmatpush1.msra.mxu0 0.0
        %891 = vmatprep.subr.mxu0 0.0
        %892 = vmatpush1.msra.mxu0 0.0
        %893 = vmatprep.subr.mxu0 0.0
        %894 = vmatpush1.msra.mxu0 0.0
        %895 = vmatprep.subr.mxu0 0.0
        %896 = vmatpush1.msra.mxu0 0.0
        %897 = vmatprep.subr.mxu0 0.0
        %898 = vmatpush1.msra.mxu0 0.0
        %899 = vmatprep.subr.mxu0 0.0
        %900 = vmatpush1.msra.mxu0 0.0
        %901 = vmatprep.subr.mxu0 0.0
        %902 = vmatpush1.msra.mxu0 0.0
        %903 = vmatprep.subr.mxu0 0.0
        %904 = vmatpush1.msra.mxu0 0.0
        %905 = vmatprep.mubr.f32.mxu0 0.0
        %906 = vmatmul.mubr.f32.gmra.mrb[0].mxu0 %v731
        %v907 = vpop.f32.mrb[0].mxu0
        %v908 = vadd.f32 0.0, %v907
        %v909 = vpop.f32.mrb[0].mxu0
        %910 = vmatprep.mubr.f32.mxu0 0.0
        %911 = vmatmul.mubr.f32.gmra.mrb[0].mxu0 %v732
        %v912 = vpop.f32.mrb[0].mxu0
        %v913 = vadd.f32 0.0, %v912
        %v914 = vpop.f32.mrb[0].mxu0
        %915 = vdwg.mxu0
        %s916 = scalar_lea.vmem [#allocation7], 256
        %v917 = vld [vmem:[%s916] sm:$0xff]
        %v918 = vld [vmem:[%s916 + $0x8] sm:$0xff]
        %v919 = vld [vmem:[%s916 + $0x10] sm:$0xff]
        %v920 = vld [vmem:[%s916 + $0x18] sm:$0xff]
        %v921 = vld [vmem:[%s916 + $0x20] sm:$0xff]
        %v922 = vld [vmem:[%s916 + $0x28] sm:$0xff]
        %v923 = vld [vmem:[%s916 + $0x30] sm:$0xff]
        %v924 = vld [vmem:[%s916 + $0x38] sm:$0xff]
        %v925 = vld [vmem:[%s916 + $0x40] sm:$0xff]
        %v926 = vld [vmem:[%s916 + $0x48] sm:$0xff]
        %v927 = vld [vmem:[%s916 + $0x50] sm:$0xff]
        %v928 = vld [vmem:[%s916 + $0x58] sm:$0xff]
        %v929 = vld [vmem:[%s916 + $0x60] sm:$0xff]
        %v930 = vld [vmem:[%s916 + $0x68] sm:$0xff]
        %v931 = vld [vmem:[%s916 + $0x70] sm:$0xff]
        %v932 = vld [vmem:[%s916 + $0x78] sm:$0xff]
        %933 = vmatprep.subr.mxu0 0.0
        %934 = vmatpush1.msra.mxu0 %v917
        %935 = vmatprep.subr.mxu0 0.0
        %936 = vmatpush1.msra.mxu0 %v918
        %937 = vmatprep.subr.mxu0 0.0
        %938 = vmatpush1.msra.mxu0 %v919
        %939 = vmatprep.subr.mxu0 0.0
        %940 = vmatpush1.msra.mxu0 %v920
        %941 = vmatprep.subr.mxu0 0.0
        %942 = vmatpush1.msra.mxu0 %v921
        %943 = vmatprep.subr.mxu0 0.0
        %944 = vmatpush1.msra.mxu0 %v922
        %945 = vmatprep.subr.mxu0 0.0
        %946 = vmatpush1.msra.mxu0 %v923
        %947 = vmatprep.subr.mxu0 0.0
        %948 = vmatpush1.msra.mxu0 %v924
        %949 = vmatprep.subr.mxu0 0.0
        %950 = vmatpush1.msra.mxu0 %v925
        %951 = vmatprep.subr.mxu0 0.0
        %952 = vmatpush1.msra.mxu0 %v926
        %953 = vmatprep.subr.mxu0 0.0
        %954 = vmatpush1.msra.mxu0 %v927
        %955 = vmatprep.subr.mxu0 0.0
        %956 = vmatpush1.msra.mxu0 %v928
        %957 = vmatprep.subr.mxu0 0.0
        %958 = vmatpush1.msra.mxu0 %v929
        %959 = vmatprep.subr.mxu0 0.0
        %960 = vmatpush1.msra.mxu0 %v930
        %961 = vmatprep.subr.mxu0 0.0
        %962 = vmatpush1.msra.mxu0 %v931
        %963 = vmatprep.subr.mxu0 0.0
        %964 = vmatpush1.msra.mxu0 %v932
        %965 = vmatprep.subr.mxu0 0.0
        %966 = vmatpush1.msra.mxu0 0.0
        %967 = vmatprep.subr.mxu0 0.0
        %968 = vmatpush1.msra.mxu0 0.0
        %969 = vmatprep.subr.mxu0 0.0
        %970 = vmatpush1.msra.mxu0 0.0
        %971 = vmatprep.subr.mxu0 0.0
        %972 = vmatpush1.msra.mxu0 0.0
        %973 = vmatprep.subr.mxu0 0.0
        %974 = vmatpush1.msra.mxu0 0.0
        %975 = vmatprep.subr.mxu0 0.0
        %976 = vmatpush1.msra.mxu0 0.0
        %977 = vmatprep.subr.mxu0 0.0
        %978 = vmatpush1.msra.mxu0 0.0
        %979 = vmatprep.subr.mxu0 0.0
        %980 = vmatpush1.msra.mxu0 0.0
        %981 = vmatprep.subr.mxu0 0.0
        %982 = vmatpush1.msra.mxu0 0.0
        %983 = vmatprep.subr.mxu0 0.0
        %984 = vmatpush1.msra.mxu0 0.0
        %985 = vmatprep.subr.mxu0 0.0
        %986 = vmatpush1.msra.mxu0 0.0
        %987 = vmatprep.subr.mxu0 0.0
        %988 = vmatpush1.msra.mxu0 0.0
        %989 = vmatprep.subr.mxu0 0.0
        %990 = vmatpush1.msra.mxu0 0.0
        %991 = vmatprep.subr.mxu0 0.0
        %992 = vmatpush1.msra.mxu0 0.0
        %993 = vmatprep.subr.mxu0 0.0
        %994 = vmatpush1.msra.mxu0 0.0
        %995 = vmatprep.subr.mxu0 0.0
        %996 = vmatpush1.msra.mxu0 0.0
        %997 = vmatprep.mubr.f32.mxu0 0.0
        %998 = vmatmul.mubr.f32.gmra.mrb[0].mxu0 %v731
        %v999 = vpop.f32.mrb[0].mxu0
        %v1000 = vadd.f32 0.0, %v999
        %v1001 = vpop.f32.mrb[0].mxu0
        %1002 = vmatprep.mubr.f32.mxu0 0.0
        %1003 = vmatmul.mubr.f32.gmra.mrb[0].mxu0 %v732
        %v1004 = vpop.f32.mrb[0].mxu0
        %v1005 = vadd.f32 0.0, %v1004
        %v1006 = vpop.f32.mrb[0].mxu0
        %1007 = vdwg.mxu0
        %1008 = vmatprep.subr.mxu0 0.0
        %1009 = vmatpush1.msra.mxu0 %v816
        %1010 = vmatprep.subr.mxu0 0.0
        %1011 = vmatpush1.msra.mxu0 %v821
        %1012 = vmatprep.subr.mxu0 0.0
        %1013 = vmatpush1.msra.mxu0 0.0
        %1014 = vmatprep.subr.mxu0 0.0
        %1015 = vmatpush1.msra.mxu0 0.0
        %1016 = vmatprep.subr.mxu0 0.0
        %1017 = vmatpush1.msra.mxu0 0.0
        %1018 = vmatprep.subr.mxu0 0.0
        %1019 = vmatpush1.msra.mxu0 0.0
        %1020 = vmatprep.subr.mxu0 0.0
        %1021 = vmatpush1.msra.mxu0 0.0
        %1022 = vmatprep.subr.mxu0 0.0
        %1023 = vmatpush1.msra.mxu0 0.0
        %1024 = vmatprep.subr.mxu0 0.0
        %1025 = vmatpush1.msra.mxu0 0.0
        %1026 = vmatprep.subr.mxu0 0.0
        %1027 = vmatpush1.msra.mxu0 0.0
        %1028 = vmatprep.subr.mxu0 0.0
        %1029 = vmatpush1.msra.mxu0 0.0
        %1030 = vmatprep.subr.mxu0 0.0
        %1031 = vmatpush1.msra.mxu0 0.0
        %1032 = vmatprep.subr.mxu0 0.0
        %1033 = vmatpush1.msra.mxu0 0.0
        %1034 = vmatprep.subr.mxu0 0.0
        %1035 = vmatpush1.msra.mxu0 0.0
        %1036 = vmatprep.subr.mxu0 0.0
        %1037 = vmatpush1.msra.mxu0 0.0
        %1038 = vmatprep.subr.mxu0 0.0
        %1039 = vmatpush1.msra.mxu0 0.0
        %1040 = vmatprep.subr.mxu0 0.0
        %1041 = vmatpush1.msra.mxu0 0.0
        %1042 = vmatprep.subr.mxu0 0.0
        %1043 = vmatpush1.msra.mxu0 0.0
        %1044 = vmatprep.subr.mxu0 0.0
        %1045 = vmatpush1.msra.mxu0 0.0
        %1046 = vmatprep.subr.mxu0 0.0
        %1047 = vmatpush1.msra.mxu0 0.0
        %1048 = vmatprep.subr.mxu0 0.0
        %1049 = vmatpush1.msra.mxu0 0.0
        %1050 = vmatprep.subr.mxu0 0.0
        %1051 = vmatpush1.msra.mxu0 0.0
        %1052 = vmatprep.subr.mxu0 0.0
        %1053 = vmatpush1.msra.mxu0 0.0
        %1054 = vmatprep.subr.mxu0 0.0
        %1055 = vmatpush1.msra.mxu0 0.0
        %1056 = vmatprep.subr.mxu0 0.0
        %1057 = vmatpush1.msra.mxu0 0.0
        %1058 = vmatprep.subr.mxu0 0.0
        %1059 = vmatpush1.msra.mxu0 0.0
        %1060 = vmatprep.subr.mxu0 0.0
        %1061 = vmatpush1.msra.mxu0 0.0
        %1062 = vmatprep.subr.mxu0 0.0
        %1063 = vmatpush1.msra.mxu0 0.0
        %1064 = vmatprep.subr.mxu0 0.0
        %1065 = vmatpush1.msra.mxu0 0.0
        %1066 = vmatprep.subr.mxu0 0.0
        %1067 = vmatpush1.msra.mxu0 0.0
        %1068 = vmatprep.subr.mxu0 0.0
        %1069 = vmatpush1.msra.mxu0 0.0
        %1070 = vmatprep.subr.mxu0 0.0
        %1071 = vmatpush1.msra.mxu0 0.0
        %1072 = vmatprep.mubr.f32.mxu0 0.0
        %1073 = vmatmul.mubr.f32.gmra.mrb[0].mxu0 %v555
        %v1074 = vpop.f32.mrb[0].mxu0
        %v1075 = vadd.f32 %v908, %v1074
        %v1076 = vpop.f32.mrb[0].mxu0
        %1077 = vmatprep.mubr.f32.mxu0 0.0
        %1078 = vmatmul.mubr.f32.gmra.mrb[0].mxu0 %v558
        %v1079 = vpop.f32.mrb[0].mxu0
        %v1080 = vadd.f32 %v913, %v1079
        %v1081 = vpop.f32.mrb[0].mxu0
        %1082 = vdwg.mxu0
        %1083 = vmatprep.subr.mxu0 0.0
        %1084 = vmatpush1.msra.mxu0 %v1000
        %1085 = vmatprep.subr.mxu0 0.0
        %1086 = vmatpush1.msra.mxu0 %v1005
        %1087 = vmatprep.subr.mxu0 0.0
        %1088 = vmatpush1.msra.mxu0 0.0
        %1089 = vmatprep.subr.mxu0 0.0
        %1090 = vmatpush1.msra.mxu0 0.0
        %1091 = vmatprep.subr.mxu0 0.0
        %1092 = vmatpush1.msra.mxu0 0.0
        %1093 = vmatprep.subr.mxu0 0.0
        %1094 = vmatpush1.msra.mxu0 0.0
        %1095 = vmatprep.subr.mxu0 0.0
        %1096 = vmatpush1.msra.mxu0 0.0
        %1097 = vmatprep.subr.mxu0 0.0
        %1098 = vmatpush1.msra.mxu0 0.0
        %1099 = vmatprep.subr.mxu0 0.0
        %1100 = vmatpush1.msra.mxu0 0.0
        %1101 = vmatprep.subr.mxu0 0.0
        %1102 = vmatpush1.msra.mxu0 0.0
        %1103 = vmatprep.subr.mxu0 0.0
        %1104 = vmatpush1.msra.mxu0 0.0
        %1105 = vmatprep.subr.mxu0 0.0
        %1106 = vmatpush1.msra.mxu0 0.0
        %1107 = vmatprep.subr.mxu0 0.0
        %1108 = vmatpush1.msra.mxu0 0.0
        %1109 = vmatprep.subr.mxu0 0.0
        %1110 = vmatpush1.msra.mxu0 0.0
        %1111 = vmatprep.subr.mxu0 0.0
        %1112 = vmatpush1.msra.mxu0 0.0
        %1113 = vmatprep.subr.mxu0 0.0
        %1114 = vmatpush1.msra.mxu0 0.0
        %1115 = vmatprep.subr.mxu0 0.0
        %1116 = vmatpush1.msra.mxu0 0.0
        %1117 = vmatprep.subr.mxu0 0.0
        %1118 = vmatpush1.msra.mxu0 0.0
        %1119 = vmatprep.subr.mxu0 0.0
        %1120 = vmatpush1.msra.mxu0 0.0
        %1121 = vmatprep.subr.mxu0 0.0
        %1122 = vmatpush1.msra.mxu0 0.0
        %1123 = vmatprep.subr.mxu0 0.0
        %1124 = vmatpush1.msra.mxu0 0.0
        %1125 = vmatprep.subr.mxu0 0.0
        %1126 = vmatpush1.msra.mxu0 0.0
        %1127 = vmatprep.subr.mxu0 0.0
        %1128 = vmatpush1.msra.mxu0 0.0
        %1129 = vmatprep.subr.mxu0 0.0
        %1130 = vmatpush1.msra.mxu0 0.0
        %1131 = vmatprep.subr.mxu0 0.0
        %1132 = vmatpush1.msra.mxu0 0.0
        %1133 = vmatprep.subr.mxu0 0.0
        %1134 = vmatpush1.msra.mxu0 0.0
        %1135 = vmatprep.subr.mxu0 0.0
        %1136 = vmatpush1.msra.mxu0 0.0
        %1137 = vmatprep.subr.mxu0 0.0
        %1138 = vmatpush1.msra.mxu0 0.0
        %1139 = vmatprep.subr.mxu0 0.0
        %1140 = vmatpush1.msra.mxu0 0.0
        %1141 = vmatprep.subr.mxu0 0.0
        %1142 = vmatpush1.msra.mxu0 0.0
        %1143 = vmatprep.subr.mxu0 0.0
        %1144 = vmatpush1.msra.mxu0 0.0
        %1145 = vmatprep.subr.mxu0 0.0
        %1146 = vmatpush1.msra.mxu0 0.0
        %1147 = vmatprep.mubr.f32.mxu0 0.0
        %1148 = vmatmul.mubr.f32.gmra.mrb[0].mxu0 %v636
        %v1149 = vpop.f32.mrb[0].mxu0
        %v1150 = vadd.f32 0.0, %v1149
        %v1151 = vpop.f32.mrb[0].mxu0
        %1152 = vmatprep.mubr.f32.mxu0 0.0
        %1153 = vmatmul.mubr.f32.gmra.mrb[0].mxu0 %v639
        %v1154 = vpop.f32.mrb[0].mxu0
        %v1155 = vadd.f32 0.0, %v1154
        %v1156 = vpop.f32.mrb[0].mxu0
        %1157 = vdwg.mxu0
        %v1158 = vadd.f32 %v1075, %v1150
        %v1159 = vadd.f32 %v1080, %v1155
        %v1160 = vld [vmem:[%s4] sm:$0x1]
        %v1162 = vlaneseq
        %v1163 = vshrl.u32 %v1162, 7
        %v1164 = vsub.s32 0, %v1163
        %v1165 = vrot.slane %v1160, %v1164
        %v1167 = vadd.f32 %v1158, %v1165
        %v1168 = vadd.f32 %v1159, %v1165
        %vm1169 = vcmp.ge.f32.partialorder %v1167, 0.0
        %vm1170 = vcmp.ge.f32.partialorder %v1168, 0.0
        %v1171 = vmul.f32 %v1167, 0.2
        %v1172 = vmul.f32 %v1168, 0.2
        %v1173 = vsel %vm1169, %v1167, %v1171
        %v1174 = vsel %vm1170, %v1168, %v1172
        %1175 = vst [vmem:[%s271] sm:$0xff] %v1173
        %1176 = vst [vmem:[%s271 + $0x8] sm:$0xff] %v1174
        %s1177 = sand.u32 %s141, 1
        %s1178 = scalar_lea.sflag [#allocation4], %s1177
        %s1179 = sand.u32 %s141, 1
        %s1180 = smul.addr %s1179, 16
        %s1181 = scalar_lea.vmem [#allocation8], %s1180
        // Predicated region
        $region53: #{tpu_custom_call.1} parent=39 // pred_check
          %p1182 = pneg %p151
        $region54: #{tpu_custom_call.1} parent=39 // pred_check_branch
          %1184 = sbr.rel (%p1182) target = $region56
        $region55: #{tpu_custom_call.1} parent=39 // pred_region
          %s1186 = ssub.s32 256, 256
          %1187 = vsyncadd %s1178, %s1186
          %s1188 = smul.addr %s23, 2
          %s1189 = smul.addr %s1188, 128
          %s1190 = scalar_lea.hbm %s5, %s1189
          %s1191 = sshll.u32 %s1181, 4
          %s1192 = int_to_ptr.vmem [resolvable:$true] %s1191
          %1197 = dma.vmem_to_hbm [thread:$0]  %s1192, 256, %s1190, %s1178, 128, 128, 8
        $region56: #{tpu_custom_call.1} parent=39 // pred_fallthru
          _
      $region40: #{tpu_custom_call.1} parent=5 // pred_fallthru
        _
      %p1198 = scmp.le.s32.totalorder 2, %s18
      // Predicated region
      $region57: #{tpu_custom_call.1} parent=5 // pred_check
        %p1199 = pneg %p1198
      $region58: #{tpu_custom_call.1} parent=5 // pred_check_branch
        %1201 = sbr.rel (%p1199) target = $region60
      $region59: #{tpu_custom_call.1} parent=5 // pred_region
        %s1202 = ssub.s32 %s18, 2
        // Predicated region
        $region61: #{tpu_custom_call.1} parent=59 // pred_check
          %p1203 = pneg %p157
        $region62: #{tpu_custom_call.1} parent=59 // pred_check_branch
          %1205 = sbr.rel (%p1203) target = $region64
        $region63: #{tpu_custom_call.1} parent=59 // pred_region
          %s1206 = sand.u32 %s142, 1
          %s1207 = scalar_lea.sflag [#allocation4], %s1206
          %s1208 = sand.u32 %s142, 1
          %s1209 = smul.addr %s1208, 16
          %s1210 = scalar_lea.vmem [#allocation8], %s1209
          %1211 = dma.done %s1207, 256
        $region64: #{tpu_custom_call.1} parent=59 // pred_fallthru
          _
      $region60: #{tpu_custom_call.1} parent=5 // pred_fallthru
        _
    $region6: #{tpu_custom_call.1} parent=1 // loop_footer
      %s22 = sadd.s32 1, %s18
    $region7: #{tpu_custom_call.1} parent=1 // loop_footer_branch
      %17 = sbr.rel target = $region3
    $region8: #{tpu_custom_call.1} parent=1 // loop_exit
      _
    %1212 = vsyncpa [#allocation3], 1
    %s1213 = scalar_lea.sflag [#allocation3], 1
    %1214 = vsyncpa %s1213, 1
    %1215 = vsyncpa [#allocation6], 1
    %1216 = vsyncpa [#allocation4], 1
    %s1217 = scalar_lea.sflag [#allocation4], 1
    %1218 = vsyncpa %s1217, 1

</llo_original>
